<compile_context>
chip_gen: v6e
topology: v6e:2x2x1
jax: 0.10.0
libtpu: 0.0.40
codegen_flags: <defaults>
</compile_context>

<pallas_src>
import functools

import jax
import jax.numpy as jnp
from jax.experimental import pallas as pl
from jax.experimental.pallas import tpu as pltpu


# ---------------------------------------------------------------------------
# Kernels
# ---------------------------------------------------------------------------
def _transform_kernel(x_ref, w_ref, z_ref):
    """Z[row_tile] = X[row_tile] @ W  (bf16 operands, f32 accumulation)."""
    z_ref[...] = jnp.dot(
        x_ref[...], w_ref[...], preferred_element_type=jnp.float32
    ).astype(z_ref.dtype)


def _aggregate_kernel(a_ref, z_ref, b_ref, o_ref, acc_ref, *, apply_relu):
    """H[row_tile] = A_hat[row_tile, :] @ Z + b  (K-tiled, f32 accumulator)."""
    k = pl.program_id(1)

    @pl.when(k == 0)
    def _():
        acc_ref[...] = jnp.zeros_like(acc_ref)

    acc_ref[...] += jnp.dot(
        a_ref[...], z_ref[...], preferred_element_type=jnp.float32
    )

    @pl.when(k == pl.num_programs(1) - 1)
    def _():
        h = acc_ref[...] + b_ref[...]
        if apply_relu:
            h = jnp.maximum(h, 0.0)
        o_ref[...] = h.astype(o_ref.dtype)


# ---------------------------------------------------------------------------
# pallas_call wrappers
# ---------------------------------------------------------------------------
_COMPILER_PARAMS_1D = pltpu.CompilerParams(
    dimension_semantics=("parallel",), vmem_limit_bytes=48 << 20
)
_COMPILER_PARAMS_2D = pltpu.CompilerParams(
    dimension_semantics=("parallel", "arbitrary"), vmem_limit_bytes=48 << 20
)


def gcn_transform(x, w, *, tm):
    n, f_in = x.shape
    f_out = w.shape[1]
    return pl.pallas_call(
        _transform_kernel,
        out_shape=jax.ShapeDtypeStruct((n, f_out), jnp.bfloat16),
        grid=(n // tm,),
        in_specs=[
            pl.BlockSpec((tm, f_in), lambda i: (i, 0)),
            pl.BlockSpec((f_in, f_out), lambda i: (0, 0)),
        ],
        out_specs=pl.BlockSpec((tm, f_out), lambda i: (i, 0)),
        compiler_params=_COMPILER_PARAMS_1D,
    )(x, w)


def gcn_aggregate(a, z, b, *, apply_relu, out_dtype, tm, tk):
    n = a.shape[0]
    f_out = z.shape[1]
    kernel = functools.partial(_aggregate_kernel, apply_relu=apply_relu)
    return pl.pallas_call(
        kernel,
        out_shape=jax.ShapeDtypeStruct((n, f_out), out_dtype),
        grid=(n // tm, n // tk),
        in_specs=[
            pl.BlockSpec((tm, tk), lambda i, k: (i, k)),
            pl.BlockSpec((tk, f_out), lambda i, k: (k, 0)),
            pl.BlockSpec((1, f_out), lambda i, k: (0, 0)),
        ],
        out_specs=pl.BlockSpec((tm, f_out), lambda i, k: (i, 0)),
        scratch_shapes=[pltpu.VMEM((tm, f_out), jnp.float32)],
        compiler_params=_COMPILER_PARAMS_2D,
    )(a, z, b)


# ---------------------------------------------------------------------------
# Forward pass
# ---------------------------------------------------------------------------
def _round_up(x, m):
    return (x + m - 1) // m * m


def _pad2d(x, rows, cols):
    r, c = x.shape
    return jnp.pad(x, ((0, rows - r), (0, cols - c)))


def gcn3_forward(a_hat, x, params, *, tm=128, tk=128):
    """a_hat: [N,N] normalized adjacency, x: [N,in_dim], params: dict of W/b."""
    n, in_dim = x.shape
    hid1 = params["w1"].shape[1]
    hid2 = params["w2"].shape[1]
    out_dim = params["w3"].shape[1]

    # Lane-dense padding: N and all feature dims up to multiples of 128.
    n_pad = _round_up(n, 128)
    tm = min(tm, n_pad)
    tk = min(tk, n_pad)
    f_pad = [_round_up(d, 128) for d in (in_dim, hid1, hid2, out_dim)]

    bf = jnp.bfloat16
    a_p = _pad2d(a_hat, n_pad, n_pad).astype(bf)     # padded cols are zero, so
    h = _pad2d(x, n_pad, f_pad[0]).astype(bf)        # pad rows never propagate

    layers = [
        (params["w1"], params["b1"], f_pad[0], f_pad[1], True),
        (params["w2"], params["b2"], f_pad[1], f_pad[2], True),
        (params["w3"], params["b3"], f_pad[2], f_pad[3], False),
    ]
    for w, b, fi_p, fo_p, relu in layers:
        w_p = _pad2d(w, fi_p, fo_p).astype(bf)
        b_p = _pad2d(b.reshape(1, -1), 1, fo_p).astype(jnp.float32)
        z = gcn_transform(h, w_p, tm=tm)
        out_dtype = bf if relu else jnp.float32      # hidden layers feed MXU
        h = gcn_aggregate(
            a_p, z, b_p, apply_relu=relu, out_dtype=out_dtype, tm=tm, tk=tk
        )
        # dropout(p=0.5) is identity in eval mode (training=False).

    return h[:n, :out_dim]


# ---------------------------------------------------------------------------
# Graph preprocessing + params (plain JAX)
# ---------------------------------------------------------------------------
def build_normalized_adjacency(edge_index, num_nodes):
    """Dense GCN normalization: D^{-1/2} (A + I) D^{-1/2}. Messages src->dst."""
    src, dst = edge_index[0], edge_index[1]
    a = jnp.zeros((num_nodes, num_nodes), jnp.float32).at[dst, src].set(1.0)
    a = a + jnp.eye(num_nodes, dtype=jnp.float32)          # add self-loops
    deg = a.sum(axis=1)
    d_inv_sqrt = jnp.where(deg > 0, 1.0 / jnp.sqrt(deg), 0.0)
    return a * d_inv_sqrt[:, None] * d_inv_sqrt[None, :]


def init_params(key, in_dim, hid_1_dim, hid_2_dim, out_dim):
    """Deterministic glorot-style init (synthetic; GCNConv bias starts at 0)."""
    k1, k2, k3 = jax.random.split(key, 3)

    def glorot(k, fan_in, fan_out):
        lim = jnp.sqrt(6.0 / (fan_in + fan_out))
        return jax.random.uniform(k, (fan_in, fan_out), jnp.float32, -lim, lim)

    return {
        "w1": glorot(k1, in_dim, hid_1_dim),
        "b1": jnp.zeros((hid_1_dim,), jnp.float32),
        "w2": glorot(k2, hid_1_dim, hid_2_dim),
        "b2": jnp.zeros((hid_2_dim,), jnp.float32),
        "w3": glorot(k3, hid_2_dim, out_dim),
        "b3": jnp.zeros((out_dim,), jnp.float32),
    }


def ref_forward_bf16(a, x, p):
    """Pure-JAX reference mimicking the kernel's bf16 operand quantization."""
    bf = jnp.bfloat16
    a_b = a.astype(bf)
    h = x.astype(bf)
    for wk, bk, relu in (("w1", "b1", True), ("w2", "b2", True), ("w3", "b3", False)):
        z = jnp.dot(h, p[wk].astype(bf),
                    preferred_element_type=jnp.float32).astype(bf)
        hf = jnp.dot(a_b, z, preferred_element_type=jnp.float32) + p[bk]
        if relu:
            h = jnp.maximum(hf, 0.0).astype(bf)
        else:
            h = hf
    return h


# ---------------------------------------------------------------------------
# Main
# ---------------------------------------------------------------------------
if __name__ == "__main__":
    key = jax.random.PRNGKey(0)
    kx, kp = jax.random.split(key)

    # Small synthetic graph: 16 nodes, bidirectional ring (32 directed edges).
    N, IN_DIM, HID1, HID2, OUT_DIM = 16, 8, 32, 16, 4
    fwd = jnp.stack([jnp.arange(N), (jnp.arange(N) + 1) % N])
    bwd = jnp.stack([(jnp.arange(N) + 1) % N, jnp.arange(N)])
    edge_index = jnp.concatenate([fwd, bwd], axis=1).astype(jnp.int32)  # [2,32]

    x = jax.random.normal(kx, (N, IN_DIM), jnp.float32)
    params = init_params(kp, IN_DIM, HID1, HID2, OUT_DIM)
    a_hat = build_normalized_adjacency(edge_index, N)

    out = gcn3_forward(a_hat, x, params)
    jax.block_until_ready(out)

    expected = ref_forward_bf16(a_hat, x, params)
    assert out.shape == (N, OUT_DIM)
    max_err = float(jnp.max(jnp.abs(out - expected)))
    assert jnp.allclose(out, expected, atol=1e-2, rtol=1e-2), max_err

    print("KERNEL_OK")
</pallas_src>

<mosaic_0001>
module attributes {stable_mosaic.version = 11 : i64} {
  func.func @_transform_kernel(%arg0: i32, %arg1: memref<128x128xbf16, #tpu.memory_space<vmem>>, %arg2: memref<128x128xbf16, #tpu.memory_space<vmem>>, %arg3: memref<128x128xbf16, #tpu.memory_space<vmem>>) attributes {dimension_semantics = [#tpu.dimension_semantics<parallel>], iteration_bounds = array<i64: 1>, scalar_prefetch = 0 : i64, scratch_operands = 0 : i64, tpu.core_type = #tpu.core_type<tc>, window_params = [{transform_indices = @transform_0, window_bounds = array<i64: 128, 128>}, {pipeline_mode = #tpu.pipeline_mode<synchronous>, transform_indices = @transform_1, window_bounds = array<i64: 128, 128>}, {transform_indices = @transform_2, window_bounds = array<i64: 128, 128>}]} {
    %c0 = arith.constant 0 : index
    %c0_0 = arith.constant 0 : index
    %0 = vector.load %arg1[%c0, %c0_0] : memref<128x128xbf16, #tpu.memory_space<vmem>>, vector<128x128xbf16>
    %c0_1 = arith.constant 0 : index
    %c0_2 = arith.constant 0 : index
    %1 = vector.load %arg2[%c0_1, %c0_2] : memref<128x128xbf16, #tpu.memory_space<vmem>>, vector<128x128xbf16>
    %cst = arith.constant dense<0.000000e+00> : vector<128x128xf32>
    %2 = tpu.matmul %0, %1, %cst {dimension_numbers = #tpu.dot_dimension_numbers<[1], [0], [0], [1], [0, 0, 1, 1], [], []>} : vector<128x128xbf16>, vector<128x128xbf16>, vector<128x128xf32> -> vector<128x128xf32>
    %3 = arith.truncf %2 : vector<128x128xf32> to vector<128x128xbf16>
    %c0_3 = arith.constant 0 : index
    %c0_4 = arith.constant 0 : index
    %4 = vector.load %arg3[%c0_3, %c0_4] : memref<128x128xbf16, #tpu.memory_space<vmem>>, vector<128x128xbf16>
    tpu.vector_store %arg3[%c0_3, %c0_4], %3 {strides = array<i32>} : memref<128x128xbf16, #tpu.memory_space<vmem>>, vector<128x128xbf16>,
    return
  }
  func.func @transform_0(%arg0: i32) -> (i32, i32) {
    %c0_i32 = arith.constant 0 : i32
    %c0_i32_0 = arith.constant 0 : i32
    return %arg0, %c0_i32 : i32, i32
  }
  func.func @transform_1(%arg0: i32) -> (i32, i32) {
    %c0_i32 = arith.constant 0 : i32
    %c0_i32_0 = arith.constant 0 : i32
    %c0_i32_1 = arith.constant 0 : i32
    return %c0_i32, %c0_i32_0 : i32, i32
  }
  func.func @transform_2(%arg0: i32) -> (i32, i32) {
    %c0_i32 = arith.constant 0 : i32
    %c0_i32_0 = arith.constant 0 : i32
    return %arg0, %c0_i32 : i32, i32
  }
}

</mosaic_0001>

<llo_original>
// kernel: tpu_custom_call.1
$region0: #{tpu_custom_call.1}
  #allocation0 [shape = 'u32[]', space=smem, size = 0x4, offset = 0x4, fixed_abs, tag = 'smem constant byte address 0x4 - core index']
  #allocation1 [shape = 'u32[144,128]{1,0:T(1,128)}', space=vmem, size = 0x12000, scoped, tag = 'internal scratch']
  %s0 = inlined_call_operand.hbm [shape: bf16[128,128], index: 0, kind: input, shape index: {}]
  %s1 = inlined_call_operand.hbm [shape: bf16[128,128], index: 1, kind: input, shape index: {}]
  %s2 = inlined_call_operand.hbm [shape: bf16[128,128], index: 2, kind: output, shape index: {}]
  %s3 = sld [smem:[#allocation0]]
  $region26: #{tpu_custom_call.1} parent=0
    _
  %s5 = ssub.s32 1, %s3
  %s6 = scalar_select 0, %s5, %s3
  $region1: #{tpu_custom_call.1} parent=0
    #allocation2 [shape = 'u8[32768]{0}', space=vmem, size = 0x8000, scoped, tag = 'input window, operand 0, single buffered']
    #allocation3 [shape = 's32[1]{0}', space=sflag, size = 0x4, scoped, tag = 'scoped memory for tpu_custom_call.1']
    #allocation4 [shape = 's32[1]{0}', space=sflag, size = 0x4, scoped, tag = 'scoped memory for tpu_custom_call.1']
    #allocation5 [shape = 'u8[32768]{0}', space=vmem, size = 0x8000, scoped, tag = 'input window, operand 1, single buffered']
    #allocation6 [shape = 's32[1]{0}', space=sflag, size = 0x4, scoped, tag = 'scoped memory for tpu_custom_call.1']
    #allocation7 [shape = 'u8[32768]{0}', space=vmem, size = 0x8000, scoped, tag = 'output window, operand 0, single buffered']
    %7 = vsyncpa [#allocation3], 0
    %8 = vsyncpa [#allocation6], 0
    %9 = vsyncpa [#allocation4], 0
    // Predicated region
    $region2: #{tpu_custom_call.1} parent=1 // pred_check
      _
    $region3: #{tpu_custom_call.1} parent=1 // pred_check_branch
      %11 = sbr.rel (0) target = $region5
    $region4: #{tpu_custom_call.1} parent=1 // pred_region
      %s13 = ssub.s32 1024, 1024
      %14 = vsyncadd [#allocation3], %s13
      %s15 = sshll.u32 [#allocation2], 4
      %s16 = int_to_ptr.vmem [resolvable:$true] %s15
      %21 = dma.hbm_to_vmem [thread:$0]  %s0, 1024, %s16, [#allocation3], 64, 64, 4
    $region5: #{tpu_custom_call.1} parent=1 // pred_fallthru
      _
    // Predicated region
    $region6: #{tpu_custom_call.1} parent=1 // pred_check
      _
    $region7: #{tpu_custom_call.1} parent=1 // pred_check_branch
      %23 = sbr.rel (0) target = $region9
    $region8: #{tpu_custom_call.1} parent=1 // pred_region
      %s25 = ssub.s32 1024, 1024
      %26 = vsyncadd [#allocation6], %s25
      %s27 = sshll.u32 [#allocation5], 4
      %s28 = int_to_ptr.vmem [resolvable:$true] %s27
      %33 = dma.hbm_to_vmem [thread:$0]  %s1, 1024, %s28, [#allocation6], 64, 64, 4
    $region9: #{tpu_custom_call.1} parent=1 // pred_fallthru
      _
    // Predicated region
    $region10: #{tpu_custom_call.1} parent=1 // pred_check
      _
    $region11: #{tpu_custom_call.1} parent=1 // pred_check_branch
      %35 = sbr.rel (0) target = $region13
    $region12: #{tpu_custom_call.1} parent=1 // pred_region
      %36 = dma.done [#allocation3], 1024
    $region13: #{tpu_custom_call.1} parent=1 // pred_fallthru
      _
    // Predicated region
    $region14: #{tpu_custom_call.1} parent=1 // pred_check
      _
    $region15: #{tpu_custom_call.1} parent=1 // pred_check_branch
      %38 = sbr.rel (0) target = $region17
    $region16: #{tpu_custom_call.1} parent=1 // pred_region
      %39 = dma.done [#allocation6], 1024
    $region17: #{tpu_custom_call.1} parent=1 // pred_fallthru
      _
    %v41 = vld [vmem:[#allocation2] sm:$0xf]
    %v42 = vld [vmem:[#allocation2 + $0x4] sm:$0xf]
    %v43 = vld [vmem:[#allocation2 + $0x8] sm:$0xf]
    %v44 = vld [vmem:[#allocation2 + $0xc] sm:$0xf]
    %v45 = vld [vmem:[#allocation2 + $0x10] sm:$0xf]
    %v46 = vld [vmem:[#allocation2 + $0x14] sm:$0xf]
    %v47 = vld [vmem:[#allocation2 + $0x18] sm:$0xf]
    %v48 = vld [vmem:[#allocation2 + $0x1c] sm:$0xf]
    %v49 = vld [vmem:[#allocation2 + $0x20] sm:$0xf]
    %v50 = vld [vmem:[#allocation2 + $0x24] sm:$0xf]
    %v51 = vld [vmem:[#allocation2 + $0x28] sm:$0xf]
    %v52 = vld [vmem:[#allocation2 + $0x2c] sm:$0xf]
    %v53 = vld [vmem:[#allocation2 + $0x30] sm:$0xf]
    %v54 = vld [vmem:[#allocation2 + $0x34] sm:$0xf]
    %v55 = vld [vmem:[#allocation2 + $0x38] sm:$0xf]
    %v56 = vld [vmem:[#allocation2 + $0x3c] sm:$0xf]
    %v57 = vld [vmem:[#allocation5] sm:$0xf]
    %v58 = vld [vmem:[#allocation5 + $0x4] sm:$0xf]
    %v59 = vld [vmem:[#allocation5 + $0x8] sm:$0xf]
    %v60 = vld [vmem:[#allocation5 + $0xc] sm:$0xf]
    %v61 = vld [vmem:[#allocation5 + $0x10] sm:$0xf]
    %v62 = vld [vmem:[#allocation5 + $0x14] sm:$0xf]
    %v63 = vld [vmem:[#allocation5 + $0x18] sm:$0xf]
    %v64 = vld [vmem:[#allocation5 + $0x1c] sm:$0xf]
    %v65 = vld [vmem:[#allocation5 + $0x20] sm:$0xf]
    %v66 = vld [vmem:[#allocation5 + $0x24] sm:$0xf]
    %v67 = vld [vmem:[#allocation5 + $0x28] sm:$0xf]
    %v68 = vld [vmem:[#allocation5 + $0x2c] sm:$0xf]
    %v69 = vld [vmem:[#allocation5 + $0x30] sm:$0xf]
    %v70 = vld [vmem:[#allocation5 + $0x34] sm:$0xf]
    %v71 = vld [vmem:[#allocation5 + $0x38] sm:$0xf]
    %v72 = vld [vmem:[#allocation5 + $0x3c] sm:$0xf]
    %v89 = vunpack.c.l.b16 %v41
    %v90 = vunpack.c.l.b16 %v42
    %v91 = vunpack.c.l.b16 %v43
    %v92 = vunpack.c.l.b16 %v44
    %v93 = vunpack.c.l.b16 %v45
    %v94 = vunpack.c.l.b16 %v46
    %v95 = vunpack.c.l.b16 %v47
    %v96 = vunpack.c.l.b16 %v48
    %v97 = vunpack.c.l.b16 %v49
    %v98 = vunpack.c.l.b16 %v50
    %v99 = vunpack.c.l.b16 %v51
    %v100 = vunpack.c.l.b16 %v52
    %v101 = vunpack.c.l.b16 %v53
    %v102 = vunpack.c.l.b16 %v54
    %v103 = vunpack.c.l.b16 %v55
    %v104 = vunpack.c.l.b16 %v56
    %v105 = vpack.c.b16 %v90, %v89
    %v106 = vpack.c.b16 %v92, %v91
    %v107 = vpack.c.b16 %v94, %v93
    %v108 = vpack.c.b16 %v96, %v95
    %v109 = vpack.c.b16 %v98, %v97
    %v110 = vpack.c.b16 %v100, %v99
    %v111 = vpack.c.b16 %v102, %v101
    %v112 = vpack.c.b16 %v104, %v103
    %v137 = vunpack.c.l.b16 %v57
    %v138 = vunpack.c.l.b16 %v58
    %v139 = vunpack.c.l.b16 %v59
    %v140 = vunpack.c.l.b16 %v60
    %v141 = vunpack.c.l.b16 %v61
    %v142 = vunpack.c.l.b16 %v62
    %v143 = vunpack.c.l.b16 %v63
    %v144 = vunpack.c.l.b16 %v64
    %v145 = vunpack.c.l.b16 %v65
    %v146 = vunpack.c.l.b16 %v66
    %v147 = vunpack.c.l.b16 %v67
    %v148 = vunpack.c.l.b16 %v68
    %v149 = vunpack.c.l.b16 %v69
    %v150 = vunpack.c.l.b16 %v70
    %v151 = vunpack.c.l.b16 %v71
    %v152 = vunpack.c.l.b16 %v72
    %v153 = vpack.c.b16 %v138, %v137
    %v154 = vpack.c.b16 %v140, %v139
    %v155 = vpack.c.b16 %v142, %v141
    %v156 = vpack.c.b16 %v144, %v143
    %v157 = vpack.c.b16 %v146, %v145
    %v158 = vpack.c.b16 %v148, %v147
    %v159 = vpack.c.b16 %v150, %v149
    %v160 = vpack.c.b16 %v152, %v151
    %169 = vmatprep.subr.bf16.mxu0 0
    %170 = vmatpush1.bf16.msra.mxu0 %v160
    %171 = vmatprep.subr.bf16.mxu0 0
    %172 = vmatpush1.bf16.msra.mxu0 %v159
    %173 = vmatprep.subr.bf16.mxu0 0
    %174 = vmatpush1.bf16.msra.mxu0 %v158
    %175 = vmatprep.subr.bf16.mxu0 0
    %176 = vmatpush1.bf16.msra.mxu0 %v157
    %177 = vmatprep.subr.bf16.mxu0 0
    %178 = vmatpush1.bf16.msra.mxu0 %v156
    %179 = vmatprep.subr.bf16.mxu0 0
    %180 = vmatpush1.bf16.msra.mxu0 %v155
    %181 = vmatprep.subr.bf16.mxu0 0
    %182 = vmatpush1.bf16.msra.mxu0 %v154
    %183 = vmatprep.subr.bf16.mxu0 0
    %184 = vmatpush1.bf16.msra.mxu0 %v153
    %185 = vmatprep.subr.bf16.mxu0 0
    %186 = vmatpush2.bf16.msra.mxu0 0
    %187 = vmatprep.subr.bf16.mxu0 0
    %188 = vmatpush2.bf16.msra.mxu0 0
    %189 = vmatprep.subr.bf16.mxu0 0
    %190 = vmatpush2.bf16.msra.mxu0 0
    %191 = vmatprep.subr.bf16.mxu0 0
    %192 = vmatpush2.bf16.msra.mxu0 0
    %193 = vmatprep.subr.bf16.mxu0 0
    %194 = vmatpush2.bf16.msra.mxu0 0
    %195 = vmatprep.subr.bf16.mxu0 0
    %196 = vmatpush2.bf16.msra.mxu0 0
    %197 = vmatprep.subr.bf16.mxu0 0
    %198 = vmatpush2.bf16.msra.mxu0 0
    %199 = vmatprep.subr.bf16.mxu0 0
    %200 = vmatpush2.bf16.msra.mxu0 0
    %201 = vmatprep.mubr.bf16.mxu0 0
    %202 = vmatmul.mubr.bf16.gmra.mxu0 %v105
    %v203 = vpop.f32.mrf.mxu0
    %v204 = vadd.f32 0.0, %v203
    %v205 = vpop.f32.mrf.mxu0
    %v206 = vpop.f32.mrf.mxu0
    %v207 = vadd.f32 0.0, %v206
    %v208 = vpop.f32.mrf.mxu0
    %209 = vmatprep.mubr.bf16.mxu0 0
    %210 = vmatmul.mubr.bf16.gmra.mxu0 %v106
    %v211 = vpop.f32.mrf.mxu0
    %v212 = vadd.f32 0.0, %v211
    %v213 = vpop.f32.mrf.mxu0
    %v214 = vpop.f32.mrf.mxu0
    %v215 = vadd.f32 0.0, %v214
    %v216 = vpop.f32.mrf.mxu0
    %217 = vmatprep.mubr.bf16.mxu0 0
    %218 = vmatmul.mubr.bf16.gmra.mxu0 %v107
    %v219 = vpop.f32.mrf.mxu0
    %v220 = vadd.f32 0.0, %v219
    %v221 = vpop.f32.mrf.mxu0
    %v222 = vpop.f32.mrf.mxu0
    %v223 = vadd.f32 0.0, %v222
    %v224 = vpop.f32.mrf.mxu0
    %225 = vmatprep.mubr.bf16.mxu0 0
    %226 = vmatmul.mubr.bf16.gmra.mxu0 %v108
    %v227 = vpop.f32.mrf.mxu0
    %v228 = vadd.f32 0.0, %v227
    %v229 = vpop.f32.mrf.mxu0
    %v230 = vpop.f32.mrf.mxu0
    %v231 = vadd.f32 0.0, %v230
    %v232 = vpop.f32.mrf.mxu0
    %233 = vmatprep.mubr.bf16.mxu0 0
    %234 = vmatmul.mubr.bf16.gmra.mxu0 %v109
    %v235 = vpop.f32.mrf.mxu0
    %v236 = vadd.f32 0.0, %v235
    %v237 = vpop.f32.mrf.mxu0
    %v238 = vpop.f32.mrf.mxu0
    %v239 = vadd.f32 0.0, %v238
    %v240 = vpop.f32.mrf.mxu0
    %241 = vmatprep.mubr.bf16.mxu0 0
    %242 = vmatmul.mubr.bf16.gmra.mxu0 %v110
    %v243 = vpop.f32.mrf.mxu0
    %v244 = vadd.f32 0.0, %v243
    %v245 = vpop.f32.mrf.mxu0
    %v246 = vpop.f32.mrf.mxu0
    %v247 = vadd.f32 0.0, %v246
    %v248 = vpop.f32.mrf.mxu0
    %249 = vmatprep.mubr.bf16.mxu0 0
    %250 = vmatmul.mubr.bf16.gmra.mxu0 %v111
    %v251 = vpop.f32.mrf.mxu0
    %v252 = vadd.f32 0.0, %v251
    %v253 = vpop.f32.mrf.mxu0
    %v254 = vpop.f32.mrf.mxu0
    %v255 = vadd.f32 0.0, %v254
    %v256 = vpop.f32.mrf.mxu0
    %257 = vmatprep.mubr.bf16.mxu0 0
    %258 = vmatmul.mubr.bf16.gmra.mxu0 %v112
    %v259 = vpop.f32.mrf.mxu0
    %v260 = vadd.f32 0.0, %v259
    %v261 = vpop.f32.mrf.mxu0
    %v262 = vpop.f32.mrf.mxu0
    %v263 = vadd.f32 0.0, %v262
    %v264 = vpop.f32.mrf.mxu0
    %265 = vdwg.mxu0
    %v266 = vpack.c.bf16 %v207, %v204
    %v267 = vpack.c.bf16 %v215, %v212
    %v268 = vpack.c.bf16 %v223, %v220
    %v269 = vpack.c.bf16 %v231, %v228
    %v270 = vpack.c.bf16 %v239, %v236
    %v271 = vpack.c.bf16 %v247, %v244
    %v272 = vpack.c.bf16 %v255, %v252
    %v273 = vpack.c.bf16 %v263, %v260
    %v282 = vunpack.c.l.b16 %v266
    %v283 = vunpack.c.h.b16 %v266
    %v284 = vunpack.c.l.b16 %v267
    %v285 = vunpack.c.h.b16 %v267
    %v286 = vunpack.c.l.b16 %v268
    %v287 = vunpack.c.h.b16 %v268
    %v288 = vunpack.c.l.b16 %v269
    %v289 = vunpack.c.h.b16 %v269
    %v290 = vunpack.c.l.b16 %v270
    %v291 = vunpack.c.h.b16 %v270
    %v292 = vunpack.c.l.b16 %v271
    %v293 = vunpack.c.h.b16 %v271
    %v294 = vunpack.c.l.b16 %v272
    %v295 = vunpack.c.h.b16 %v272
    %v296 = vunpack.c.l.b16 %v273
    %v297 = vunpack.c.h.b16 %v273
    %v298 = vpack.c.b16 %v282, %v282
    %v299 = vpack.c.b16 %v283, %v283
    %v300 = vpack.c.b16 %v284, %v284
    %v301 = vpack.c.b16 %v285, %v285
    %v302 = vpack.c.b16 %v286, %v286
    %v303 = vpack.c.b16 %v287, %v287
    %v304 = vpack.c.b16 %v288, %v288
    %v305 = vpack.c.b16 %v289, %v289
    %v306 = vpack.c.b16 %v290, %v290
    %v307 = vpack.c.b16 %v291, %v291
    %v308 = vpack.c.b16 %v292, %v292
    %v309 = vpack.c.b16 %v293, %v293
    %v310 = vpack.c.b16 %v294, %v294
    %v311 = vpack.c.b16 %v295, %v295
    %v312 = vpack.c.b16 %v296, %v296
    %v313 = vpack.c.b16 %v297, %v297
    %330 = vst [vmem:[#allocation7] sm:$0xf] %v298
    %331 = vst [vmem:[#allocation7 + $0x4] sm:$0xf] %v299
    %332 = vst [vmem:[#allocation7 + $0x8] sm:$0xf] %v300
    %333 = vst [vmem:[#allocation7 + $0xc] sm:$0xf] %v301
    %334 = vst [vmem:[#allocation7 + $0x10] sm:$0xf] %v302
    %335 = vst [vmem:[#allocation7 + $0x14] sm:$0xf] %v303
    %336 = vst [vmem:[#allocation7 + $0x18] sm:$0xf] %v304
    %337 = vst [vmem:[#allocation7 + $0x1c] sm:$0xf] %v305
    %338 = vst [vmem:[#allocation7 + $0x20] sm:$0xf] %v306
    %339 = vst [vmem:[#allocation7 + $0x24] sm:$0xf] %v307
    %340 = vst [vmem:[#allocation7 + $0x28] sm:$0xf] %v308
    %341 = vst [vmem:[#allocation7 + $0x2c] sm:$0xf] %v309
    %342 = vst [vmem:[#allocation7 + $0x30] sm:$0xf] %v310
    %343 = vst [vmem:[#allocation7 + $0x34] sm:$0xf] %v311
    %344 = vst [vmem:[#allocation7 + $0x38] sm:$0xf] %v312
    %345 = vst [vmem:[#allocation7 + $0x3c] sm:$0xf] %v313
    // Predicated region
    $region18: #{tpu_custom_call.1} parent=1 // pred_check
      _
    $region19: #{tpu_custom_call.1} parent=1 // pred_check_branch
      %347 = sbr.rel (0) target = $region21
    $region20: #{tpu_custom_call.1} parent=1 // pred_region
      %s349 = ssub.s32 1024, 1024
      %350 = vsyncadd [#allocation4], %s349
      %s351 = sshll.u32 [#allocation7], 4
      %s352 = int_to_ptr.vmem [resolvable:$true] %s351
      %357 = dma.vmem_to_hbm [thread:$0]  %s352, 1024, %s2, [#allocation4], 64, 64, 4
    $region21: #{tpu_custom_call.1} parent=1 // pred_fallthru
      _
    // Predicated region
    $region22: #{tpu_custom_call.1} parent=1 // pred_check
      _
    $region23: #{tpu_custom_call.1} parent=1 // pred_check_branch
      %359 = sbr.rel (0) target = $region25
    $region24: #{tpu_custom_call.1} parent=1 // pred_region
      %360 = dma.done [#allocation4], 1024
    $region25: #{tpu_custom_call.1} parent=1 // pred_fallthru
      _
    %361 = vsyncpa [#allocation3], 1
    %362 = vsyncpa [#allocation6], 1
    %363 = vsyncpa [#allocation4], 1

</llo_original>
